<compile_context>
chip_gen: v7x
topology: tpu7x:2x2x1
jax: 0.10.0
libtpu: 0.0.40
codegen_flags: <defaults>
</compile_context>

<pallas_src>
import numpy as np
import jax
import jax.numpy as jnp
from jax.experimental import pallas as pl
from jax.experimental.pallas import tpu as pltpu  # noqa: F401  (TPU backend import)


# ----------------------------------------------------------------------------- #
# Host-side constant construction (numpy -> baked constants under jit)
# ----------------------------------------------------------------------------- #
def _interp_matrix_np(out_size, in_size):
    """Row-interpolation matrix replicating F.interpolate(mode='bilinear',
    align_corners=True) along one axis.  Shape (out_size, in_size)."""
    if out_size == 1:
        src = np.zeros((1,), np.float64)
    else:
        scale = (in_size - 1) / (out_size - 1)
        src = np.arange(out_size, dtype=np.float64) * scale
    i0 = np.clip(np.floor(src).astype(np.int64), 0, in_size - 1)
    i1 = np.clip(i0 + 1, 0, in_size - 1)
    w1 = src - i0
    w0 = 1.0 - w1
    rows = np.arange(out_size)
    mat = np.zeros((out_size, in_size), np.float64)
    mat[rows, i0] += w0
    mat[rows, i1] += w1
    return mat


def _resize_matrix_np(in_h, in_w, out_h, out_w):
    """Pre-transposed combined interpolation matrix R of shape (in_h*in_w, out_h*out_w)
    such that  out_flat = mask_flat @ R  reproduces bilinear align_corners=True resize."""
    wh = _interp_matrix_np(out_h, in_h)   # (out_h, in_h)
    ww = _interp_matrix_np(out_w, in_w)   # (out_w, in_w)
    # kron(wh, ww)[oh*out_w + ow, h*in_w + w] = wh[oh, h] * ww[ow, w]
    return np.kron(wh, ww).T.astype(np.float32)


# ----------------------------------------------------------------------------- #
# Fused kernel: masked composition + both mask resizes, single invocation (grid=()).
# ----------------------------------------------------------------------------- #
def _fused_kernel(img_ref, m2_ref, m3_ref, r_ref, out_img_ref, out_rs_ref):
    # Both bilinear resizes fused into one lane-dense MXU matmul:
    #   (B, HW) f32 @ (HW, 128) f32 -> (B, 128) f32   (cols = [half | quarter | zero-pad])
    out_rs_ref[...] = jnp.dot(
        m2_ref[...], r_ref[...], preferred_element_type=jnp.float32
    )

    # images_masked = images * (1 - masks) + masks, mask broadcast over channels
    # (sublane broadcast from the size-1 channel dim).
    m3 = m3_ref[...]                                   # (B, 1, HW) f32
    img = img_ref[...].astype(jnp.float32)             # (B, C, HW)
    out_img_ref[...] = (img * (1.0 - m3) + m3).astype(out_img_ref.dtype)


def inpainting_model_forward(images, masks):
    """Pallas equivalent of InpaintingModel.forward up to the generator call.

    Returns the tuple of tensors that would be handed to the generator:
    (images_masked, masks, scaled_masks_half, scaled_masks_quarter).
    """
    B, C, H, W = images.shape
    assert masks.shape == (B, 1, H, W)
    HW = H * W
    Ho2, Wo2 = H // 2, W // 2
    Ho4, Wo4 = H // 4, W // 4
    n_half = Ho2 * Wo2
    n_quarter = Ho4 * Wo4
    n_out = n_half + n_quarter
    pad = max(128, ((n_out + 127) // 128) * 128)       # lane-dense padded output width

    img_dtype = images.dtype
    mask_dtype = masks.dtype

    # Compile-time constant interpolation matrix, half and quarter fused along the
    # output axis and zero-padded to `pad` lanes.  Kept in float32 always.
    r_np = np.zeros((HW, pad), np.float32)
    r_np[:, :n_half] = _resize_matrix_np(H, W, Ho2, Wo2)
    r_np[:, n_half:n_out] = _resize_matrix_np(H, W, Ho4, Wo4)
    r_fused = jnp.asarray(r_np)                                        # (HW, pad) f32

    # Free metadata reshapes of contiguous NCHW storage; lane dim = HW (mult. of 128).
    images3d = images.reshape(B, C, HW)
    masks2d = masks.reshape(B, HW).astype(jnp.float32)                 # matmul operand
    masks3d = masks.reshape(B, 1, HW).astype(jnp.float32)              # compose operand

    itemsize = np.dtype(img_dtype).itemsize
    cost = pl.CostEstimate(
        flops=2 * B * HW * pad + 3 * B * C * HW,
        transcendentals=0,
        bytes_accessed=(2 * B * C * HW * itemsize        # images in + out
                        + 2 * B * HW * 4                 # mask (two views)
                        + HW * pad * 4                   # fused resize matrix
                        + B * pad * 4),                  # resized output
    )

    out_img3d, resized = pl.pallas_call(
        _fused_kernel,
        out_shape=(
            jax.ShapeDtypeStruct((B, C, HW), img_dtype),
            jax.ShapeDtypeStruct((B, pad), jnp.float32),
        ),
        cost_estimate=cost,
    )(images3d, masks2d, masks3d, r_fused)

    images_masked = out_img3d.reshape(B, C, H, W)
    scaled_masks_half = resized[:, :n_half].reshape(B, 1, Ho2, Wo2).astype(mask_dtype)
    scaled_masks_quarter = resized[:, n_half:n_out].reshape(B, 1, Ho4, Wo4).astype(mask_dtype)
    return images_masked, masks, scaled_masks_half, scaled_masks_quarter


# ----------------------------------------------------------------------------- #
# Main
# ----------------------------------------------------------------------------- #
if __name__ == "__main__":
    key = jax.random.PRNGKey(0)
    k_img, k_msk = jax.random.split(key)

    B, C, H, W = 2, 3, 16, 16
    images = jax.random.uniform(k_img, (B, C, H, W), dtype=jnp.float32)
    masks = (jax.random.uniform(k_msk, (B, 1, H, W)) > 0.5).astype(jnp.float32)

    fwd = jax.jit(inpainting_model_forward)
    images_masked, masks_out, m_half, m_quarter = jax.block_until_ready(
        fwd(images, masks)
    )

    # Pure-JAX reference check (same math, no Pallas).
    ref_masked = images * (1.0 - masks) + masks
    wh2 = jnp.asarray(_interp_matrix_np(H // 2, H), jnp.float32)
    ww2 = jnp.asarray(_interp_matrix_np(W // 2, W), jnp.float32)
    wh4 = jnp.asarray(_interp_matrix_np(H // 4, H), jnp.float32)
    ww4 = jnp.asarray(_interp_matrix_np(W // 4, W), jnp.float32)
    ref_half = jnp.einsum("oh,bchw,pw->bcop", wh2, masks, ww2)
    ref_quarter = jnp.einsum("oh,bchw,pw->bcop", wh4, masks, ww4)

    assert images_masked.shape == (B, C, H, W)
    assert m_half.shape == (B, 1, H // 2, W // 2)
    assert m_quarter.shape == (B, 1, H // 4, W // 4)
    assert jnp.allclose(images_masked, ref_masked, atol=1e-5)
    assert jnp.allclose(m_half, ref_half, atol=1e-5)
    assert jnp.allclose(m_quarter, ref_quarter, atol=1e-5)

    print("KERNEL_OK")
</pallas_src>

<mosaic_0001>
module attributes {stable_mosaic.version = 11 : i64} {
  func.func @_fused_kernel(%arg0: memref<2x3x256xf32, #tpu.memory_space<vmem>>, %arg1: memref<2x256xf32, #tpu.memory_space<vmem>>, %arg2: memref<2x1x256xf32, #tpu.memory_space<vmem>>, %arg3: memref<256x128xf32, #tpu.memory_space<vmem>>, %arg4: memref<2x3x256xf32, #tpu.memory_space<vmem>>, %arg5: memref<2x128xf32, #tpu.memory_space<vmem>>) attributes {dimension_semantics = [], scalar_prefetch = 0 : i64, scratch_operands = 0 : i64, tpu.core_type = #tpu.core_type<tc>} {
    %c0 = arith.constant 0 : index
    %c0_0 = arith.constant 0 : index
    %0 = vector.load %arg1[%c0, %c0_0] : memref<2x256xf32, #tpu.memory_space<vmem>>, vector<2x256xf32>
    %c0_1 = arith.constant 0 : index
    %c0_2 = arith.constant 0 : index
    %1 = vector.load %arg3[%c0_1, %c0_2] : memref<256x128xf32, #tpu.memory_space<vmem>>, vector<256x128xf32>
    %cst = arith.constant dense<0.000000e+00> : vector<2x128xf32>
    %2 = tpu.matmul %0, %1, %cst {dimension_numbers = #tpu.dot_dimension_numbers<[1], [0], [0], [1], [0, 0, 1, 1], [], []>} : vector<2x256xf32>, vector<256x128xf32>, vector<2x128xf32> -> vector<2x128xf32>
    %c0_3 = arith.constant 0 : index
    %c0_4 = arith.constant 0 : index
    %3 = vector.load %arg5[%c0_3, %c0_4] : memref<2x128xf32, #tpu.memory_space<vmem>>, vector<2x128xf32>
    tpu.vector_store %arg5[%c0_3, %c0_4], %2 {strides = array<i32>} : memref<2x128xf32, #tpu.memory_space<vmem>>, vector<2x128xf32>,
    %c0_5 = arith.constant 0 : index
    %c0_6 = arith.constant 0 : index
    %c0_7 = arith.constant 0 : index
    %4 = vector.load %arg2[%c0_5, %c0_6, %c0_7] : memref<2x1x256xf32, #tpu.memory_space<vmem>>, vector<2x1x256xf32>
    %c0_8 = arith.constant 0 : index
    %c0_9 = arith.constant 0 : index
    %c0_10 = arith.constant 0 : index
    %5 = vector.load %arg0[%c0_8, %c0_9, %c0_10] : memref<2x3x256xf32, #tpu.memory_space<vmem>>, vector<2x3x256xf32>
    %cst_11 = arith.constant 1.000000e+00 : f32
    %6 = vector.broadcast %cst_11 : f32 to vector<2x1x256xf32>
    %7 = arith.subf %6, %4 : vector<2x1x256xf32>
    %8 = vector.broadcast %7 : vector<2x1x256xf32> to vector<2x3x256xf32>
    %9 = arith.mulf %5, %8 : vector<2x3x256xf32>
    %10 = vector.broadcast %4 : vector<2x1x256xf32> to vector<2x3x256xf32>
    %11 = arith.addf %9, %10 : vector<2x3x256xf32>
    %c0_12 = arith.constant 0 : index
    %c0_13 = arith.constant 0 : index
    %c0_14 = arith.constant 0 : index
    %12 = vector.load %arg4[%c0_12, %c0_13, %c0_14] : memref<2x3x256xf32, #tpu.memory_space<vmem>>, vector<2x3x256xf32>
    tpu.vector_store %arg4[%c0_12, %c0_13, %c0_14], %11 {strides = array<i32>} : memref<2x3x256xf32, #tpu.memory_space<vmem>>, vector<2x3x256xf32>,
    return
  }
}

</mosaic_0001>

<llo_original>
// kernel: inpainting_model_forward.1
$region0: #{inpainting_model_forward.1}
  #allocation0 [shape = 'u32[]', space=smem, size = 0x4, offset = 0x4, fixed_abs, tag = 'smem constant byte address 0x4 - core index']
  #allocation1 [shape = 'u32[144,128]{1,0:T(1,128)}', space=vmem, size = 0x12000, scoped, tag = 'internal scratch']
  %s0 = inlined_call_operand.vmem [shape: f32[2,3,256], index: 0, kind: input, shape index: {}]
  %s1 = inlined_call_operand.vmem [shape: f32[2,256], index: 1, kind: input, shape index: {}]
  %s2 = inlined_call_operand.vmem [shape: f32[2,1,256], index: 2, kind: input, shape index: {}]
  %s3 = inlined_call_operand.hbm [shape: f32[256,128], index: 3, kind: input, shape index: {}]
  %s4 = inlined_call_operand.vmem [shape: f32[2,3,256], index: 4, kind: output, shape index: {0}]
  %s5 = inlined_call_operand.vmem [shape: f32[2,128], index: 5, kind: output, shape index: {1}]
  %6 = xla_tuple %s4, %s5
  %s7 = sld [smem:[#allocation0]]
  $region38: #{inpainting_model_forward.1} parent=0
    _
  %s9 = ssub.s32 1, %s7
  %s10 = scalar_select 0, %s9, %s7
  $region1: #{inpainting_model_forward.1} parent=0
    #allocation2 [shape = 'u8[131072]{0}', space=vmem, size = 0x20000, scoped, tag = 'input window, operand 3, single buffered']
    #allocation3 [shape = 's32[1]{0}', space=sflag, size = 0x4, scoped, tag = 'scoped memory for inpainting_model_forward.1']
    %11 = vsyncpa [#allocation3], 0
    // Predicated region
    $region2: #{inpainting_model_forward.1} parent=1 // pred_check
      _
    $region3: #{inpainting_model_forward.1} parent=1 // pred_check_branch
      %13 = sbr.rel (0) target = $region5
    $region4: #{inpainting_model_forward.1} parent=1 // pred_region
      _
    $region5: #{inpainting_model_forward.1} parent=1 // pred_fallthru
      _
    // Predicated region
    $region6: #{inpainting_model_forward.1} parent=1 // pred_check
      _
    $region7: #{inpainting_model_forward.1} parent=1 // pred_check_branch
      %15 = sbr.rel (0) target = $region9
    $region8: #{inpainting_model_forward.1} parent=1 // pred_region
      _
    $region9: #{inpainting_model_forward.1} parent=1 // pred_fallthru
      _
    // Predicated region
    $region10: #{inpainting_model_forward.1} parent=1 // pred_check
      _
    $region11: #{inpainting_model_forward.1} parent=1 // pred_check_branch
      %17 = sbr.rel (0) target = $region13
    $region12: #{inpainting_model_forward.1} parent=1 // pred_region
      _
    $region13: #{inpainting_model_forward.1} parent=1 // pred_fallthru
      _
    // Predicated region
    $region14: #{inpainting_model_forward.1} parent=1 // pred_check
      _
    $region15: #{inpainting_model_forward.1} parent=1 // pred_check_branch
      %19 = sbr.rel (0) target = $region17
    $region16: #{inpainting_model_forward.1} parent=1 // pred_region
      %s21 = ssub.s32 4096, 4096
      %22 = vsyncadd [#allocation3], %s21
      %s23 = sshll.u32 [#allocation2], 4
      %s24 = int_to_ptr.vmem [resolvable:$true] %s23
      %29 = dma.hbm_to_vmem [thread:$0]  %s3, 4096, %s24, [#allocation3], 128, 128, 8
    $region17: #{inpainting_model_forward.1} parent=1 // pred_fallthru
      _
    // Predicated region
    $region18: #{inpainting_model_forward.1} parent=1 // pred_check
      _
    $region19: #{inpainting_model_forward.1} parent=1 // pred_check_branch
      %31 = sbr.rel (0) target = $region21
    $region20: #{inpainting_model_forward.1} parent=1 // pred_region
      %32 = dma.done [#allocation3], 4096
    $region21: #{inpainting_model_forward.1} parent=1 // pred_fallthru
      _
    %v33 = vld [vmem:[%s1] sm:$0xf]
    %v34 = vld [vmem:[#allocation2] sm:$0xff]
    %v35 = vld [vmem:[#allocation2 + $0x8] sm:$0xff]
    %v36 = vld [vmem:[#allocation2 + $0x10] sm:$0xff]
    %v37 = vld [vmem:[#allocation2 + $0x18] sm:$0xff]
    %v38 = vld [vmem:[#allocation2 + $0x20] sm:$0xff]
    %v39 = vld [vmem:[#allocation2 + $0x28] sm:$0xff]
    %v40 = vld [vmem:[#allocation2 + $0x30] sm:$0xff]
    %v41 = vld [vmem:[#allocation2 + $0x38] sm:$0xff]
    %v42 = vld [vmem:[#allocation2 + $0x40] sm:$0xff]
    %v43 = vld [vmem:[#allocation2 + $0x48] sm:$0xff]
    %v44 = vld [vmem:[#allocation2 + $0x50] sm:$0xff]
    %v45 = vld [vmem:[#allocation2 + $0x58] sm:$0xff]
    %v46 = vld [vmem:[#allocation2 + $0x60] sm:$0xff]
    %v47 = vld [vmem:[#allocation2 + $0x68] sm:$0xff]
    %v48 = vld [vmem:[#allocation2 + $0x70] sm:$0xff]
    %v49 = vld [vmem:[#allocation2 + $0x78] sm:$0xff]
    %v50 = vld [vmem:[#allocation2 + $0x80] sm:$0xff]
    %v51 = vld [vmem:[#allocation2 + $0x88] sm:$0xff]
    %v52 = vld [vmem:[#allocation2 + $0x90] sm:$0xff]
    %v53 = vld [vmem:[#allocation2 + $0x98] sm:$0xff]
    %v54 = vld [vmem:[#allocation2 + $0xa0] sm:$0xff]
    %v55 = vld [vmem:[#allocation2 + $0xa8] sm:$0xff]
    %v56 = vld [vmem:[#allocation2 + $0xb0] sm:$0xff]
    %v57 = vld [vmem:[#allocation2 + $0xb8] sm:$0xff]
    %v58 = vld [vmem:[#allocation2 + $0xc0] sm:$0xff]
    %v59 = vld [vmem:[#allocation2 + $0xc8] sm:$0xff]
    %v60 = vld [vmem:[#allocation2 + $0xd0] sm:$0xff]
    %v61 = vld [vmem:[#allocation2 + $0xd8] sm:$0xff]
    %v62 = vld [vmem:[#allocation2 + $0xe0] sm:$0xff]
    %v63 = vld [vmem:[#allocation2 + $0xe8] sm:$0xff]
    %v64 = vld [vmem:[#allocation2 + $0xf0] sm:$0xff]
    %v65 = vld [vmem:[#allocation2 + $0xf8] sm:$0xff]
    %v68 = vunpack.c.l.s4 1983009808
    %v69 = vunpack.c.0.s8 %v68
    %v70 = vlaneseq
    %v71 = vshrl.u32 %v70, 7
    %v72 = vsub.s32 %v69, %v71
    %v73 = vrot.slane %v33, %v72
    %v74 = vcombine.high %v73, %v73
    %77 = vmatprep.subr.mxu0 0.0
    %78 = vmatpush1.msra.mxu0 %v34
    %79 = vmatprep.subr.mxu0 0.0
    %80 = vmatpush1.msra.mxu0 %v35
    %81 = vmatprep.subr.mxu0 0.0
    %82 = vmatpush1.msra.mxu0 %v36
    %83 = vmatprep.subr.mxu0 0.0
    %84 = vmatpush1.msra.mxu0 %v37
    %85 = vmatprep.subr.mxu0 0.0
    %86 = vmatpush1.msra.mxu0 %v38
    %87 = vmatprep.subr.mxu0 0.0
    %88 = vmatpush1.msra.mxu0 %v39
    %89 = vmatprep.subr.mxu0 0.0
    %90 = vmatpush1.msra.mxu0 %v40
    %91 = vmatprep.subr.mxu0 0.0
    %92 = vmatpush1.msra.mxu0 %v41
    %93 = vmatprep.subr.mxu0 0.0
    %94 = vmatpush1.msra.mxu0 %v42
    %95 = vmatprep.subr.mxu0 0.0
    %96 = vmatpush1.msra.mxu0 %v43
    %97 = vmatprep.subr.mxu0 0.0
    %98 = vmatpush1.msra.mxu0 %v44
    %99 = vmatprep.subr.mxu0 0.0
    %100 = vmatpush1.msra.mxu0 %v45
    %101 = vmatprep.subr.mxu0 0.0
    %102 = vmatpush1.msra.mxu0 %v46
    %103 = vmatprep.subr.mxu0 0.0
    %104 = vmatpush1.msra.mxu0 %v47
    %105 = vmatprep.subr.mxu0 0.0
    %106 = vmatpush1.msra.mxu0 %v48
    %107 = vmatprep.subr.mxu0 0.0
    %108 = vmatpush1.msra.mxu0 %v49
    %109 = vmatprep.subr.mxu0 0.0
    %110 = vmatpush1.msra.mxu0 %v50
    %111 = vmatprep.subr.mxu0 0.0
    %112 = vmatpush1.msra.mxu0 %v51
    %113 = vmatprep.subr.mxu0 0.0
    %114 = vmatpush1.msra.mxu0 %v52
    %115 = vmatprep.subr.mxu0 0.0
    %116 = vmatpush1.msra.mxu0 %v53
    %117 = vmatprep.subr.mxu0 0.0
    %118 = vmatpush1.msra.mxu0 %v54
    %119 = vmatprep.subr.mxu0 0.0
    %120 = vmatpush1.msra.mxu0 %v55
    %121 = vmatprep.subr.mxu0 0.0
    %122 = vmatpush1.msra.mxu0 %v56
    %123 = vmatprep.subr.mxu0 0.0
    %124 = vmatpush1.msra.mxu0 %v57
    %125 = vmatprep.subr.mxu0 0.0
    %126 = vmatpush1.msra.mxu0 %v58
    %127 = vmatprep.subr.mxu0 0.0
    %128 = vmatpush1.msra.mxu0 %v59
    %129 = vmatprep.subr.mxu0 0.0
    %130 = vmatpush1.msra.mxu0 %v60
    %131 = vmatprep.subr.mxu0 0.0
    %132 = vmatpush1.msra.mxu0 %v61
    %133 = vmatprep.subr.mxu0 0.0
    %134 = vmatpush1.msra.mxu0 %v62
    %135 = vmatprep.subr.mxu0 0.0
    %136 = vmatpush1.msra.mxu0 %v63
    %137 = vmatprep.subr.mxu0 0.0
    %138 = vmatpush1.msra.mxu0 %v64
    %139 = vmatprep.subr.mxu0 0.0
    %140 = vmatpush1.msra.mxu0 %v65
    %141 = vmatprep.mubr.f32.mxu0 %v74
    %142 = vmatmul.mubr.f32.gmra.mrb[0].mxu0 %v73
    %v143 = vpop.f32.mrb[0].mxu0
    %v144 = vadd.f32 0.0, %v143
    %v145 = vpop.f32.mrb[0].mxu0
    %146 = vdwg.mxu0
    %147 = vst [vmem:[%s5] sm:$0x3] %v144
    %v148 = vld [vmem:[%s2] sm:$0x3]
    %v149 = vld [vmem:[%s2 + $0x2] sm:$0x3]
    %v150 = vld [vmem:[%s0] sm:$0x77]
    %v151 = vld [vmem:[%s0 + $0x8] sm:$0x77]
    %v152 = vsub.f32 1.0, %v148
    %v153 = vsub.f32 1.0, %v149
    %v156 = vlaneseq
    %v157 = vshrl.u32 %v156, 7
    %v158 = vsub.s32 0, %v157
    %v159 = vrot.slane %v152, %v158
    %v160 = vlaneseq
    %v161 = vshrl.u32 %v160, 7
    %v162 = vsub.s32 1, %v161
    %v163 = vrot.slane %v152, %v162
    %v164 = vlaneseq
    %v165 = vshrl.u32 %v164, 7
    %v166 = vsub.s32 0, %v165
    %v167 = vrot.slane %v153, %v166
    %v168 = vlaneseq
    %v169 = vshrl.u32 %v168, 7
    %v170 = vsub.s32 1, %v169
    %v171 = vrot.slane %v153, %v170
    %v172 = vcombine.low %v159, %v163
    %v173 = vcombine.low %v167, %v171
    %v176 = vmul.f32 %v150, %v172
    %v177 = vmul.f32 %v151, %v173
    %v180 = vlaneseq
    %v181 = vshrl.u32 %v180, 7
    %v182 = vsub.s32 0, %v181
    %v183 = vrot.slane %v148, %v182
    %v184 = vlaneseq
    %v185 = vshrl.u32 %v184, 7
    %v186 = vsub.s32 1, %v185
    %v187 = vrot.slane %v148, %v186
    %v188 = vlaneseq
    %v189 = vshrl.u32 %v188, 7
    %v190 = vsub.s32 0, %v189
    %v191 = vrot.slane %v149, %v190
    %v192 = vlaneseq
    %v193 = vshrl.u32 %v192, 7
    %v194 = vsub.s32 1, %v193
    %v195 = vrot.slane %v149, %v194
    %v196 = vcombine.low %v183, %v187
    %v197 = vcombine.low %v191, %v195
    %v200 = vadd.f32 %v176, %v196
    %v201 = vadd.f32 %v177, %v197
    %202 = vst [vmem:[%s4] sm:$0x77] %v200
    %203 = vst [vmem:[%s4 + $0x8] sm:$0x77] %v201
    // Predicated region
    $region22: #{inpainting_model_forward.1} parent=1 // pred_check
      _
    $region23: #{inpainting_model_forward.1} parent=1 // pred_check_branch
      %205 = sbr.rel (0) target = $region25
    $region24: #{inpainting_model_forward.1} parent=1 // pred_region
      _
    $region25: #{inpainting_model_forward.1} parent=1 // pred_fallthru
      _
    // Predicated region
    $region26: #{inpainting_model_forward.1} parent=1 // pred_check
      _
    $region27: #{inpainting_model_forward.1} parent=1 // pred_check_branch
      %207 = sbr.rel (0) target = $region29
    $region28: #{inpainting_model_forward.1} parent=1 // pred_region
      _
    $region29: #{inpainting_model_forward.1} parent=1 // pred_fallthru
      _
    // Predicated region
    $region30: #{inpainting_model_forward.1} parent=1 // pred_check
      _
    $region31: #{inpainting_model_forward.1} parent=1 // pred_check_branch
      %209 = sbr.rel (0) target = $region33
    $region32: #{inpainting_model_forward.1} parent=1 // pred_region
      _
    $region33: #{inpainting_model_forward.1} parent=1 // pred_fallthru
      _
    // Predicated region
    $region34: #{inpainting_model_forward.1} parent=1 // pred_check
      _
    $region35: #{inpainting_model_forward.1} parent=1 // pred_check_branch
      %211 = sbr.rel (0) target = $region37
    $region36: #{inpainting_model_forward.1} parent=1 // pred_region
      _
    $region37: #{inpainting_model_forward.1} parent=1 // pred_fallthru
      _
    %212 = vsyncpa [#allocation3], 1

</llo_original>
